<compile_context>
chip_gen: v6e
topology: v6e:2x2x1
jax: 0.10.0
libtpu: 0.0.40
codegen_flags: <defaults>
</compile_context>

<pallas_src>
import functools

import jax
import jax.numpy as jnp
from jax.experimental import pallas as pl
from jax.experimental.pallas import tpu as pltpu


_MAX_UNROLL_PLANES = 16     # cap on x-planes per tile (in-kernel Python unroll)
# TODO(synk): replace the Python unroll over x-planes with lax.fori_loop (dynamic
# lane offsets into the col scratch) so volumes with very small (ny*nz) planes can
# use more than _MAX_UNROLL_PLANES planes per grid step.


def _round_up(v, m):
    return ((v + m - 1) // m) * m


def _default_max_tile_s():
    # 128 MiB VMEM (v5e/v6e) -> larger tile budget; 64 MiB (v7x) -> smaller.
    try:
        vmem = pltpu.get_tpu_info().vmem_capacity_bytes
    except Exception:        # no TPU / older API: be conservative (v7x-sized)
        vmem = 64 << 20
    return 16384 if vmem >= (96 << 20) else 8192


def _pick_tile_x(nx, plane, max_tile_s, max_unroll):
    """Largest x-tile whose flat spatial size is lane-aligned (%128) and fits budget."""
    divisors = [t for t in range(1, nx + 1) if nx % t == 0]
    aligned = [t for t in divisors if (t * plane) % 128 == 0 or t == nx]
    good = [t for t in aligned if t * plane <= max_tile_s and t <= max_unroll]
    if good:
        return max(good)
    # Nothing lane-aligned fits the budget (huge or awkward plane): fall back to the
    # smallest aligned tile rather than a masked tail tile, so the output BlockSpec
    # stays legal and the output stores stay unmasked.
    # TODO(synk): support a masked tail tile for prime nx with plane % 128 != 0.
    return min(aligned)


def _pointwise_gemm_kernel(x_ref, w_ref, s_ref, o_ref, *, use_act):
    """1x1x1 grouped conv == per-group GEMM.  x:(nc,tS) w:(OC,nc) s:(OC,1) o:(OC,tS)."""
    y = jnp.dot(w_ref[...], x_ref[...].astype(w_ref.dtype),
                preferred_element_type=jnp.float32)
    y = y + s_ref[...]
    if use_act:
        y = jnp.where(y > 0.0, y, 0.01 * y)             # F.leaky_relu default slope
    o_ref[...] = y.astype(o_ref.dtype)


def _grouped_conv3d_kernel(x_ref, w_ref, m_ref, s_ref, o_ref, col_ref,
                           *, k, k4, nxt, ny, nz, use_act):
    """k x k x k grouped conv for one batch group / one x-slab.

    x_ref  : (nc, X, plane_p)   f32  x-padded, (y,z)-flattened, plane-padded input
    w_ref  : (OC, K_pad)        bf16 (dy,dz | ci | dx4)-ordered flattened kernels
    m_ref  : (k*k, plane)       f32  (dy, dz) boundary masks on the flat (y,z) plane
    s_ref  : (OC, 1)            f32  per-output-channel shift
    o_ref  : (OC, nxt*plane)    f32  lane-dense flat-spatial output tile
    col_ref: (K_pad, nxt*plane) bf16 VMEM im2col scratch for the whole x-tile
    """
    nc = x_ref.shape[0]
    plane = ny * nz
    kk = k * k
    K_tot = kk * nc * k4
    K_pad, tS = col_ref.shape
    x0 = pl.multiple_of(pl.program_id(1) * nxt, nxt)    # first output x-plane of tile

    # Keep the zero-padded K rows really zero (stale VMEM could hold NaNs and
    # NaN * 0-weight = NaN).  Offset/length are k4-aligned -> full bf16 row pairs.
    if K_pad > K_tot:
        col_ref[K_tot:, :] = jnp.zeros((K_pad - K_tot, tS), col_ref.dtype)

    w = w_ref[...]                                       # hoisted: reused per tile
    s = s_ref[...]

    # ---- build the (K_pad, tS) im2col slab for the whole x-tile, in bf16 ---------
    for xl in range(nxt):                                # output x-plane within tile
        c0 = xl * plane                                  # static lane offset in col
        for t in range(kk):                              # t = dy*k + dz
            dy, dz = t // k, t % k
            start = dy * nz + dz                         # static lane offset in x
            m = m_ref[t:t + 1, :]                        # (1, plane) boundary mask
            # k4 consecutive x-planes (dx = 0..k4-1; dx >= k hits zero weights and
            # the extra zero x-pad plane, so it never contributes).
            blk = x_ref[:, pl.ds(x0 + xl, k4), :]        # (nc, k4, plane_p) f32
            blk = blk[:, :, start:start + plane]         # shift by (dy, dz)
            blk = (blk * m).astype(col_ref.dtype)        # mask y/z wrap, cast bf16
            for ci in range(nc):
                r0 = (t * nc + ci) * k4                  # k4-aligned sublane offset
                col_ref[r0:r0 + k4, c0:c0 + plane] = blk[ci]

    # ---- ONE MXU GEMM per grid step (bf16 in, f32 acc) + shift + leaky_relu ------
    # TODO(synk): optional bf16x3 / f32 operands for bit-closer parity with the f32
    # PyTorch conv -- MXU has huge slack at OC=32, K~108, so it is nearly free.
    y = jnp.dot(w, col_ref[...], preferred_element_type=jnp.float32)
    y = y + s
    if use_act:
        y = jnp.where(y > 0.0, y, 0.01 * y)
    o_ref[...] = y.astype(o_ref.dtype)                   # single lane-dense store


@functools.partial(jax.jit,
                   static_argnames=("k", "out_channel", "use_act", "max_tile_s"))
def gradless_gc_replay_nonlin_block_3d(x, ker, shift, k, out_channel,
                                       use_act=True, max_tile_s=None):
    """Pallas TPU implementation of GradlessGCReplayNonlinBlock3D.forward.

    x     : (nb, nc, nx, ny, nz) float32
    ker   : (out_channel * nb, nc, k, k, k) float32
    shift : (out_channel * nb, 1, 1, 1) float32
    """
    nb, nc, nx, ny, nz = x.shape
    OC = out_channel
    plane = ny * nz
    S = nx * plane
    if max_tile_s is None:
        max_tile_s = _default_max_tile_s()

    s = shift.reshape(nb, OC, 1).astype(jnp.float32)
    out_shape = jax.ShapeDtypeStruct((nb, OC, S), jnp.float32)

    if k == 1:
        # 1x1x1 grouped conv: plain per-group GEMM (HBM-bandwidth bound).  Big,
        # lane-dense (%128) tiles are the only lever here.
        nxt = _pick_tile_x(nx, plane, max_tile_s, max_unroll=nx)
        tS = nxt * plane
        grid = (nb, nx // nxt)
        w = ker.reshape(nb, OC, nc).astype(jnp.bfloat16)
        need = 2 * (nc * tS * 4 + OC * nc * 2 + OC * 4 + OC * tS * 4)
        cparams = pltpu.CompilerParams(
            dimension_semantics=("parallel", "parallel"),
            vmem_limit_bytes=int(min(100 << 20, max(32 << 20, int(need * 1.3)))))
        cost = pl.CostEstimate(flops=int(2 * nb * OC * nc * S), transcendentals=0,
                               bytes_accessed=int(4 * (x.size + nb * OC * S)))
        out = pl.pallas_call(
            functools.partial(_pointwise_gemm_kernel, use_act=use_act),
            out_shape=out_shape,
            grid=grid,
            in_specs=[
                pl.BlockSpec((None, nc, tS), lambda b, t: (b, 0, t)),
                pl.BlockSpec((None, OC, nc), lambda b, t: (b, 0, 0)),
                pl.BlockSpec((None, OC, 1), lambda b, t: (b, 0, 0)),
            ],
            out_specs=pl.BlockSpec((None, OC, tS), lambda b, t: (b, 0, t)),
            compiler_params=cparams,
            cost_estimate=cost,
        )(x.reshape(nb, nc, S), w, s)
        return out.reshape(nb, OC, nx, ny, nz)

    # ---- general odd k (scale_pool uses k = 3) ------------------------------------
    assert k % 2 == 1, "grouped-conv path assumes odd kernel size"
    p = k // 2
    kk = k * k
    k4 = k + (k % 2)             # k rounded up to even (3 -> 4): every col store is a
                                 # k4-row block at a k4-aligned sublane offset, so bf16
                                 # row pairs are never split (no sub-word RMW stores).
    K_tot = kk * nc * k4
    K_pad = _round_up(K_tot, 16)                     # bf16 sublane packing

    nxt = _pick_tile_x(nx, plane, max_tile_s, max_unroll=_MAX_UNROLL_PLANES)
    tS = nxt * plane
    grid = (nb, nx // nxt)

    # grouped-conv weights: group b owns rows [b*OC, (b+1)*OC); flatten to the
    # (dy, dz | ci | dx4) K-ordering used by the in-kernel im2col fill, zero-padding
    # dx to k4 and K to K_pad (zero weight columns <-> don't-care col rows).
    w = ker.reshape(nb, OC, nc, k, k, k)                        # (b, oc, ci, dx, dy, dz)
    w = jnp.pad(w, ((0, 0), (0, 0), (0, 0), (0, k4 - k), (0, 0), (0, 0)))
    w = jnp.transpose(w, (0, 1, 4, 5, 2, 3)).reshape(nb, OC, K_tot)
    w16 = jnp.pad(w, ((0, 0), (0, 0), (0, K_pad - K_tot))).astype(jnp.bfloat16)

    # x-padded, (y,z)-flattened, plane-padded input: tiny constant overhead on the
    # *input* only -- no k^3 im2col blow-up in HBM.  One extra zero x-plane at the
    # high end keeps the k4-plane reads in bounds.
    pad_o = p * (nz + 1)
    X = nx + 2 * p + (k4 - k)
    x_pp = jnp.pad(x, ((0, 0), (0, 0), (p, p + (k4 - k)), (0, 0), (0, 0)))
    x_pp = x_pp.reshape(nb, nc, X, plane)
    x_pp = jnp.pad(x_pp, ((0, 0), (0, 0), (0, 0), (pad_o, pad_o)))
    plane_p = plane + 2 * pad_o

    # boundary masks for the (dy, dz) taps over the flattened (y, z) plane
    q = jnp.arange(plane, dtype=jnp.int32)
    qy, qz = q // nz, q % nz
    mask_rows = []
    for dy in range(k):
        for dz in range(k):
            ok = ((qy + dy - p >= 0) & (qy + dy - p < ny)
                  & (qz + dz - p >= 0) & (qz + dz - p < nz))
            mask_rows.append(ok)
    masks = jnp.stack(mask_rows).astype(jnp.float32)             # (k*k, plane)

    # VMEM residency: resident x block, weights, masks, shift (all double-buffered
    # by default) + 2x output tile + bf16 col scratch, with ~30% headroom.
    need = (2 * (nc * X * plane_p * 4 + OC * K_pad * 2 + kk * plane * 4 + OC * 4
                 + OC * tS * 4)
            + K_pad * tS * 2)
    cparams = pltpu.CompilerParams(
        # nb leading & parallel: v7x's two TensorCores split by batch group, so each
        # core only holds its own groups' resident volumes.
        dimension_semantics=("parallel", "parallel"),
        vmem_limit_bytes=int(min(100 << 20, max(32 << 20, int(need * 1.3)))))
    cost = pl.CostEstimate(
        flops=int(2 * nb * OC * K_pad * S),
        transcendentals=0,
        bytes_accessed=int(4 * (x_pp.size + nb * OC * S + masks.size + s.size)
                           + 2 * w16.size))

    out = pl.pallas_call(
        functools.partial(_grouped_conv3d_kernel, k=k, k4=k4, nxt=nxt, ny=ny, nz=nz,
                          use_act=use_act),
        out_shape=out_shape,
        grid=grid,
        in_specs=[
            # Full per-group padded volume; the block index ignores the spatial-tile
            # axis so it stays VMEM-resident across the inner grid dimension.
            # TODO(synk): for volumes where 2 * nc*X*plane_p*4B approaches VMEM
            # (64 MiB on v7x), switch this input to memory_space=pl.ANY with manual
            # halo'd slab DMA (make_async_copy) or pipeline_mode=pl.Buffered(1).
            pl.BlockSpec((None, nc, X, plane_p), lambda b, t: (b, 0, 0, 0)),
            pl.BlockSpec((None, OC, K_pad), lambda b, t: (b, 0, 0)),
            pl.BlockSpec((kk, plane), lambda b, t: (0, 0)),
            pl.BlockSpec((None, OC, 1), lambda b, t: (b, 0, 0)),
        ],
        out_specs=pl.BlockSpec((None, OC, tS), lambda b, t: (b, 0, t)),
        scratch_shapes=[pltpu.VMEM((K_pad, tS), jnp.bfloat16)],
        compiler_params=cparams,
        cost_estimate=cost,
    )(x_pp, w16, masks, s)
    return out.reshape(nb, OC, nx, ny, nz)


if __name__ == "__main__":
    # Module defaults: out_channel=32, in_channel=3, scale_pool=[1, 3]
    OC, IC = 32, 3
    nb, nx, ny, nz = 2, 8, 8, 8
    scale_pool = [1, 3]
    use_act = True

    key = jax.random.PRNGKey(0)
    k_x, k_ker, k_shift = jax.random.split(key, 3)
    x = jax.random.normal(k_x, (nb, IC, nx, ny, nz), jnp.float32)

    # The PyTorch module draws k ~ Uniform(scale_pool) each forward; exercise both
    # kernel sizes deterministically (this also covers both Pallas code paths).
    for i, k in enumerate(scale_pool):
        kk_key = jax.random.fold_in(k_ker, i)
        ks_key = jax.random.fold_in(k_shift, i)
        ker = jax.random.normal(kk_key, (OC * nb, IC, k, k, k), jnp.float32)
        shift = jax.random.normal(ks_key, (OC * nb, 1, 1, 1), jnp.float32) * 1.0

        out = gradless_gc_replay_nonlin_block_3d(x, ker, shift, k, OC,
                                                 use_act=use_act)
        out = jax.block_until_ready(out)
        assert out.shape == (nb, OC, nx, ny, nz)

        # Reference: exact PyTorch semantics (grouped conv3d + shift + leaky_relu)
        ref = jax.lax.conv_general_dilated(
            x.reshape(1, nb * IC, nx, ny, nz),
            ker,
            window_strides=(1, 1, 1),
            padding=[(k // 2, k // 2)] * 3,
            dimension_numbers=("NCDHW", "OIDHW", "NCDHW"),
            feature_group_count=nb,
            precision=jax.lax.Precision.HIGHEST,
        )
        ref = ref + shift.reshape(1, nb * OC, 1, 1, 1)
        if use_act:
            ref = jnp.where(ref > 0, ref, 0.01 * ref)
        ref = ref.reshape(nb, OC, nx, ny, nz)

        max_err = float(jnp.max(jnp.abs(out - ref)))
        # bf16 MXU operands vs f32 reference: loose tolerance (output std ~ sqrt(K))
        assert jnp.allclose(out, ref, atol=2e-1, rtol=2e-2), (
            f"k={k}: max abs err = {max_err}")

    print("KERNEL_OK")
</pallas_src>

<mosaic_0001>
module attributes {stable_mosaic.version = 11 : i64} {
  func.func @_pointwise_gemm_kernel(%arg0: i32, %arg1: i32, %arg2: memref<1x3x512xf32, #tpu.memory_space<vmem>>, %arg3: memref<1x32x3xbf16, #tpu.memory_space<vmem>>, %arg4: memref<1x32x1xf32, #tpu.memory_space<vmem>>, %arg5: memref<1x32x512xf32, #tpu.memory_space<vmem>>) attributes {dimension_semantics = [#tpu.dimension_semantics<parallel>, #tpu.dimension_semantics<parallel>], iteration_bounds = array<i64: 2, 1>, scalar_prefetch = 0 : i64, scratch_operands = 0 : i64, tpu.core_type = #tpu.core_type<tc>, window_params = [{transform_indices = @transform_0, window_bounds = array<i64: 1, 3, 512>}, {transform_indices = @transform_1, window_bounds = array<i64: 1, 32, 3>}, {transform_indices = @transform_2, window_bounds = array<i64: 1, 32, 1>}, {transform_indices = @transform_3, window_bounds = array<i64: 1, 32, 512>}]} {
    %c0 = arith.constant 0 : index
    %c0_0 = arith.constant 0 : index
    %c0_1 = arith.constant 0 : index
    %0 = vector.load %arg3[%c0, %c0_0, %c0_1] : memref<1x32x3xbf16, #tpu.memory_space<vmem>>, vector<1x32x3xbf16>
    %1 = vector.shape_cast %0 : vector<1x32x3xbf16> to vector<32x3xbf16>
    %c0_2 = arith.constant 0 : index
    %c0_3 = arith.constant 0 : index
    %c0_4 = arith.constant 0 : index
    %2 = vector.load %arg2[%c0_2, %c0_3, %c0_4] : memref<1x3x512xf32, #tpu.memory_space<vmem>>, vector<1x3x512xf32>
    %3 = vector.shape_cast %2 : vector<1x3x512xf32> to vector<3x512xf32>
    %4 = arith.truncf %3 : vector<3x512xf32> to vector<3x512xbf16>
    %cst = arith.constant dense<0.000000e+00> : vector<32x512xf32>
    %5 = tpu.matmul %1, %4, %cst {dimension_numbers = #tpu.dot_dimension_numbers<[1], [0], [0], [1], [0, 0, 1, 1], [], []>} : vector<32x3xbf16>, vector<3x512xbf16>, vector<32x512xf32> -> vector<32x512xf32>
    %c0_5 = arith.constant 0 : index
    %c0_6 = arith.constant 0 : index
    %c0_7 = arith.constant 0 : index
    %6 = vector.load %arg4[%c0_5, %c0_6, %c0_7] : memref<1x32x1xf32, #tpu.memory_space<vmem>>, vector<1x32x1xf32>
    %7 = vector.shape_cast %6 : vector<1x32x1xf32> to vector<32x1xf32>
    %8 = vector.broadcast %7 : vector<32x1xf32> to vector<32x512xf32>
    %9 = arith.addf %5, %8 : vector<32x512xf32>
    %cst_8 = arith.constant 0.000000e+00 : f32
    %10 = vector.broadcast %cst_8 : f32 to vector<32x512xf32>
    %11 = arith.cmpf ogt, %9, %10 : vector<32x512xf32>
    %cst_9 = arith.constant 0.00999999977 : f32
    %12 = vector.broadcast %cst_9 : f32 to vector<32x512xf32>
    %13 = arith.mulf %12, %9 : vector<32x512xf32>
    %14 = arith.select %11, %9, %13 : vector<32x512xi1>, vector<32x512xf32>
    %c0_10 = arith.constant 0 : index
    %c0_11 = arith.constant 0 : index
    %c0_12 = arith.constant 0 : index
    %15 = vector.load %arg5[%c0_10, %c0_11, %c0_12] : memref<1x32x512xf32, #tpu.memory_space<vmem>>, vector<1x32x512xf32>
    %16 = vector.shape_cast %15 : vector<1x32x512xf32> to vector<32x512xf32>
    %17 = vector.shape_cast %14 : vector<32x512xf32> to vector<1x32x512xf32>
    tpu.vector_store %arg5[%c0_10, %c0_11, %c0_12], %17 {strides = array<i32>} : memref<1x32x512xf32, #tpu.memory_space<vmem>>, vector<1x32x512xf32>,
    return
  }
  func.func @transform_0(%arg0: i32, %arg1: i32) -> (i32, i32, i32) {
    %c0_i32 = arith.constant 0 : i32
    %c0_i32_0 = arith.constant 0 : i32
    return %arg0, %c0_i32, %arg1 : i32, i32, i32
  }
  func.func @transform_1(%arg0: i32, %arg1: i32) -> (i32, i32, i32) {
    %c0_i32 = arith.constant 0 : i32
    %c0_i32_0 = arith.constant 0 : i32
    %c0_i32_1 = arith.constant 0 : i32
    return %arg0, %c0_i32, %c0_i32_0 : i32, i32, i32
  }
  func.func @transform_2(%arg0: i32, %arg1: i32) -> (i32, i32, i32) {
    %c0_i32 = arith.constant 0 : i32
    %c0_i32_0 = arith.constant 0 : i32
    %c0_i32_1 = arith.constant 0 : i32
    return %arg0, %c0_i32, %c0_i32_0 : i32, i32, i32
  }
  func.func @transform_3(%arg0: i32, %arg1: i32) -> (i32, i32, i32) {
    %c0_i32 = arith.constant 0 : i32
    %c0_i32_0 = arith.constant 0 : i32
    return %arg0, %c0_i32, %arg1 : i32, i32, i32
  }
}

</mosaic_0001>

<llo_original>
// kernel: gradless_gc_replay_nonlin_block_3d.1
$region0: #{gradless_gc_replay_nonlin_block_3d.1}
  #allocation0 [shape = 'u32[]', space=smem, size = 0x4, offset = 0x4, fixed_abs, tag = 'smem constant byte address 0x4 - core index']
  #allocation1 [shape = 'u32[144,128]{1,0:T(1,128)}', space=vmem, size = 0x12000, scoped, tag = 'internal scratch']
  %s0 = inlined_call_operand.vmem [shape: f32[2,3,512], index: 0, kind: input, shape index: {}]
  %s1 = inlined_call_operand.vmem [shape: bf16[2,32,3], index: 1, kind: input, shape index: {}]
  %s2 = inlined_call_operand.vmem [shape: f32[2,32,1], index: 2, kind: input, shape index: {}]
  %s3 = inlined_call_operand.vmem [shape: f32[2,32,512], index: 3, kind: output, shape index: {}]
  %s4 = sld [smem:[#allocation0]]
  $region45: #{gradless_gc_replay_nonlin_block_3d.1} parent=0
    _
  %s6 = ssub.s32 1, %s4
  %s7 = scalar_select 0, %s6, %s4
  loop: start=0, step=1, limit=4
  $region2: #{gradless_gc_replay_nonlin_block_3d.1} parent=0 // loop_pre_header
    _
  $region3: #{gradless_gc_replay_nonlin_block_3d.1} parent=0 // loop_header
    %s9 = sphi 0, %s13
    %p10 = scmp.ge.s32.totalorder %s9, 4
    %s16 = sphi 0, %s28
    %s17 = sphi 0, %s24
    %s18 = sphi 0, %s16
    %s19 = sphi 0, %s17
    %s20 = sphi 0, %s18
    %s21 = sphi 0, %s19
    %s33 = sphi 0, %s35
    %s36 = sphi 0, %s33
    %s37 = sphi 0, %s36
    %s53 = sphi 0, %s37
    %s59 = sphi 0, %s61
    %s62 = sphi 0, %s59
    %s63 = sphi 0, %s62
    %s79 = sphi 0, %s63
    %s85 = sphi 0, %s87
    %s88 = sphi 0, %s85
    %s89 = sphi 0, %s88
    %s105 = sphi 0, %s89
    %s113 = sphi 0, %s115
    %s116 = sphi 0, %s113
    %s117 = sphi 0, %s116
    %s133 = sphi 0, %s117
  $region4: #{gradless_gc_replay_nonlin_block_3d.1} parent=0 // loop_header_branch
    %12 = sbr.rel (%p10) target = $region8
  $region5: #{gradless_gc_replay_nonlin_block_3d.1} parent=0 // loop_body
    %s14 = ssub.s32 %s9, 1
    %s15 = ssub.s32 %s9, 2
    %s22 = sadd.s32 1, %s17
    %p23 = scmp.ge.s32.totalorder %s22, 1
    %s24 = scalar_select %p23, 0, %s22
    %s25 = sadd.s32 1, %s16
    %s26 = scalar_select %p23, %s25, %s16
    %p27 = scmp.ge.s32.totalorder %s26, 2
    %s28 = scalar_select %p27, 0, %s26
    %s29 = ssub.s32 %s16, %s28
    %s30 = ssub.s32 %s17, %s24
    %s31 = sor.u32 %s29, %s30
    %p32 = scmp.eq.s32.totalorder %s31, 0
    %s34 = sadd.s32 %s33, 1
    %s35 = scalar_select %p32, %s33, %s34
    %p38 = pneg %p32
    %p39 = scmp.eq.s32.totalorder %s9, 1
    %p40 = por %p38, %p39
    %p41 = scmp.ne.s32.totalorder %s33, %s36
    %p42 = scmp.eq.s32.totalorder %s9, 0
    %p43 = por %p41, %p42
    %p44 = scmp.ne.s32.totalorder %s33, %s36
    %p45 = scmp.eq.s32.totalorder %s14, 1
    %p46 = por %p44, %p45
    %p47 = scmp.ne.s32.totalorder %s36, %s37
    %p48 = scmp.eq.s32.totalorder %s14, 0
    %p49 = por %p47, %p48
    %p50 = scmp.ne.s32.totalorder %s36, %s37
    %p51 = scmp.eq.s32.totalorder %s15, 1
    %p52 = por %p50, %p51
    %p54 = scmp.ne.s32.totalorder %s37, %s53
    %p55 = scmp.eq.s32.totalorder %s15, 0
    %p56 = por %p54, %p55
    %s57 = ssub.s32 %s16, %s28
    %p58 = scmp.eq.s32.totalorder %s57, 0
    %s60 = sadd.s32 %s59, 1
    %s61 = scalar_select %p58, %s59, %s60
    %p64 = pneg %p58
    %p65 = scmp.eq.s32.totalorder %s9, 1
    %p66 = por %p64, %p65
    %p67 = scmp.ne.s32.totalorder %s59, %s62
    %p68 = scmp.eq.s32.totalorder %s9, 0
    %p69 = por %p67, %p68
    %p70 = scmp.ne.s32.totalorder %s59, %s62
    %p71 = scmp.eq.s32.totalorder %s14, 1
    %p72 = por %p70, %p71
    %p73 = scmp.ne.s32.totalorder %s62, %s63
    %p74 = scmp.eq.s32.totalorder %s14, 0
    %p75 = por %p73, %p74
    %p76 = scmp.ne.s32.totalorder %s62, %s63
    %p77 = scmp.eq.s32.totalorder %s15, 1
    %p78 = por %p76, %p77
    %p80 = scmp.ne.s32.totalorder %s63, %s79
    %p81 = scmp.eq.s32.totalorder %s15, 0
    %p82 = por %p80, %p81
    %s83 = ssub.s32 %s16, %s28
    %p84 = scmp.eq.s32.totalorder %s83, 0
    %s86 = sadd.s32 %s85, 1
    %s87 = scalar_select %p84, %s85, %s86
    %p90 = pneg %p84
    %p91 = scmp.eq.s32.totalorder %s9, 1
    %p92 = por %p90, %p91
    %p93 = scmp.ne.s32.totalorder %s85, %s88
    %p94 = scmp.eq.s32.totalorder %s9, 0
    %p95 = por %p93, %p94
    %p96 = scmp.ne.s32.totalorder %s85, %s88
    %p97 = scmp.eq.s32.totalorder %s14, 1
    %p98 = por %p96, %p97
    %p99 = scmp.ne.s32.totalorder %s88, %s89
    %p100 = scmp.eq.s32.totalorder %s14, 0
    %p101 = por %p99, %p100
    %p102 = scmp.ne.s32.totalorder %s88, %s89
    %p103 = scmp.eq.s32.totalorder %s15, 1
    %p104 = por %p102, %p103
    %p106 = scmp.ne.s32.totalorder %s89, %s105
    %p107 = scmp.eq.s32.totalorder %s15, 0
    %p108 = por %p106, %p107
    %s109 = ssub.s32 %s16, %s28
    %s110 = ssub.s32 %s17, %s24
    %s111 = sor.u32 %s109, %s110
    %p112 = scmp.eq.s32.totalorder %s111, 0
    %s114 = sadd.s32 %s113, 1
    %s115 = scalar_select %p112, %s113, %s114
    %p118 = pneg %p112
    %p119 = scmp.eq.s32.totalorder %s9, 1
    %p120 = por %p118, %p119
    %p121 = scmp.ne.s32.totalorder %s113, %s116
    %p122 = scmp.eq.s32.totalorder %s9, 0
    %p123 = por %p121, %p122
    %p124 = scmp.ne.s32.totalorder %s113, %s116
    %p125 = scmp.eq.s32.totalorder %s14, 1
    %p126 = por %p124, %p125
    %p127 = scmp.ne.s32.totalorder %s116, %s117
    %p128 = scmp.eq.s32.totalorder %s14, 0
    %p129 = por %p127, %p128
    %p130 = scmp.ne.s32.totalorder %s116, %s117
    %p131 = scmp.eq.s32.totalorder %s15, 1
    %p132 = por %p130, %p131
    %p134 = scmp.ne.s32.totalorder %s117, %s133
    %p135 = scmp.eq.s32.totalorder %s15, 0
    %p136 = por %p134, %p135
    %p137 = scmp.le.s32.totalorder 1, %s9
    %p138 = scmp.lt.s32.totalorder %s9, 3
    %p139 = pnand %p137, %p138
    %p140 = pneg %p139
    // Predicated region
    $region9: #{gradless_gc_replay_nonlin_block_3d.1} parent=5 // pred_check
      _
    $region10: #{gradless_gc_replay_nonlin_block_3d.1} parent=5 // pred_check_branch
      %142 = sbr.rel (%p139) target = $region12
    $region11: #{gradless_gc_replay_nonlin_block_3d.1} parent=5 // pred_region
      %s143 = ssub.s32 %s9, 1
    $region12: #{gradless_gc_replay_nonlin_block_3d.1} parent=5 // pred_fallthru
      _
    %p144 = scmp.lt.s32.totalorder %s9, 2
    // Predicated region
    $region13: #{gradless_gc_replay_nonlin_block_3d.1} parent=5 // pred_check
      %p145 = pneg %p144
    $region14: #{gradless_gc_replay_nonlin_block_3d.1} parent=5 // pred_check_branch
      %147 = sbr.rel (%p145) target = $region16
    $region15: #{gradless_gc_replay_nonlin_block_3d.1} parent=5 // pred_region
      // Predicated region
      $region17: #{gradless_gc_replay_nonlin_block_3d.1} parent=15 // pred_check
        %p148 = pneg %p43
      $region18: #{gradless_gc_replay_nonlin_block_3d.1} parent=15 // pred_check_branch
        %150 = sbr.rel (%p148) target = $region20
      $region19: #{gradless_gc_replay_nonlin_block_3d.1} parent=15 // pred_region
        %s151 = smul.u32 4, %s17
        %p152 = scmp.lt.s32.totalorder %s16, 1
        %s153 = scalar_select %p152, %s16, 1
        %p154 = scmp.lt.s32.totalorder %s151, 3
        %s155 = scalar_select %p154, %s151, 3
        %s156 = smul.addr %s153, 4
        %s157 = sadd.s32 %s155, %s156
        %s158 = smul.addr %s157, 4
        %s159 = scalar_lea.vmem %s0, %s158
        %s160 = smul.u32 4, %s17
      $region20: #{gradless_gc_replay_nonlin_block_3d.1} parent=15 // pred_fallthru
        _
      // Predicated region
      $region21: #{gradless_gc_replay_nonlin_block_3d.1} parent=15 // pred_check
        %p161 = pneg %p69
      $region22: #{gradless_gc_replay_nonlin_block_3d.1} parent=15 // pred_check_branch
        %163 = sbr.rel (%p161) target = $region24
      $region23: #{gradless_gc_replay_nonlin_block_3d.1} parent=15 // pred_region
        %p164 = scmp.lt.s32.totalorder %s16, 1
        %s165 = scalar_select %p164, %s16, 1
        %s166 = smul.addr %s165, 4
        %s167 = smul.addr %s166, 4
        %s168 = scalar_lea.vmem %s1, %s167
      $region24: #{gradless_gc_replay_nonlin_block_3d.1} parent=15 // pred_fallthru
        _
      // Predicated region
      $region25: #{gradless_gc_replay_nonlin_block_3d.1} parent=15 // pred_check
        %p169 = pneg %p95
      $region26: #{gradless_gc_replay_nonlin_block_3d.1} parent=15 // pred_check_branch
        %171 = sbr.rel (%p169) target = $region28
      $region27: #{gradless_gc_replay_nonlin_block_3d.1} parent=15 // pred_region
        %p172 = scmp.lt.s32.totalorder %s16, 1
        %s173 = scalar_select %p172, %s16, 1
        %s174 = smul.addr %s173, 4
        %s175 = smul.addr %s174, 8
        %s176 = scalar_lea.vmem %s2, %s175
      $region28: #{gradless_gc_replay_nonlin_block_3d.1} parent=15 // pred_fallthru
        _
    $region16: #{gradless_gc_replay_nonlin_block_3d.1} parent=5 // pred_fallthru
      _
    %p177 = scmp.le.s32.totalorder 1, %s9
    %p178 = scmp.lt.s32.totalorder %s9, 3
    %p179 = pnand %p177, %p178
    %p180 = pneg %p179
    // Predicated region
    $region29: #{gradless_gc_replay_nonlin_block_3d.1} parent=5 // pred_check
      _
    $region30: #{gradless_gc_replay_nonlin_block_3d.1} parent=5 // pred_check_branch
      %182 = sbr.rel (%p179) target = $region32
    $region31: #{gradless_gc_replay_nonlin_block_3d.1} parent=5 // pred_region
      %s183 = ssub.s32 %s9, 1
      %s184 = smul.u32 4, %s19
      %p185 = scmp.lt.s32.totalorder %s18, 1
      %s186 = scalar_select %p185, %s18, 1
      %p187 = scmp.lt.s32.totalorder %s184, 3
      %s188 = scalar_select %p187, %s184, 3
      %s189 = smul.addr %s186, 4
      %s190 = sadd.s32 %s188, %s189
      %s191 = smul.addr %s190, 4
      %s192 = scalar_lea.vmem %s0, %s191
      %p193 = pneg %p49
      %p194 = pneg %p46
      %p195 = scmp.lt.s32.totalorder %s18, 1
      %s196 = scalar_select %p195, %s18, 1
      %s197 = smul.addr %s196, 4
      %s198 = smul.addr %s197, 4
      %s199 = scalar_lea.vmem %s1, %s198
      %p200 = pneg %p75
      %p201 = pneg %p72
      %p202 = scmp.lt.s32.totalorder %s18, 1
      %s203 = scalar_select %p202, %s18, 1
      %s204 = smul.addr %s203, 4
      %s205 = smul.addr %s204, 8
      %s206 = scalar_lea.vmem %s2, %s205
      %p207 = pneg %p101
      %p208 = pneg %p98
      %p209 = pneg %p129
      %p210 = pneg %p126
      %s211 = smul.u32 4, %s19
      %p212 = scmp.lt.s32.totalorder %s18, 1
      %s213 = scalar_select %p212, %s18, 1
      %p214 = scmp.lt.s32.totalorder %s211, 3
      %s215 = scalar_select %p214, %s211, 3
      %s216 = smul.addr %s213, 16
      %s217 = sadd.s32 %s215, %s216
      %s218 = smul.addr %s217, 8
      %s219 = scalar_lea.vmem %s3, %s218
      %s220 = smul.u32 4, %s19
      %p221 = scmp.lt.s32.totalorder %s18, 1
      %s222 = scalar_select %p221, %s18, 1
      %p223 = scmp.lt.s32.totalorder %s220, 3
      %s224 = scalar_select %p223, %s220, 3
      %s225 = smul.addr %s222, 4
      %s226 = sadd.s32 %s224, %s225
      %s227 = smul.addr %s226, 4
      %s228 = scalar_lea.vmem %s0, %s227
      %s229 = smul.u32 4, %s19
      %p230 = scmp.lt.s32.totalorder %s18, 1
      %s231 = scalar_select %p230, %s18, 1
      %s232 = smul.addr %s231, 4
      %s233 = smul.addr %s232, 4
      %s234 = scalar_lea.vmem %s1, %s233
      %p235 = scmp.lt.s32.totalorder %s18, 1
      %s236 = scalar_select %p235, %s18, 1
      %s237 = smul.addr %s236, 4
      %s238 = smul.addr %s237, 8
      %s239 = scalar_lea.vmem %s2, %s238
      %s240 = smul.u32 4, %s19
      %p241 = scmp.lt.s32.totalorder %s18, 1
      %s242 = scalar_select %p241, %s18, 1
      %p243 = scmp.lt.s32.totalorder %s240, 3
      %s244 = scalar_select %p243, %s240, 3
      %s245 = smul.addr %s242, 16
      %s246 = sadd.s32 %s244, %s245
      %s247 = smul.addr %s246, 8
      %s248 = scalar_lea.vmem %s3, %s247
      %s249 = smul.u32 4, %s19
      %v251 = vld [vmem:[%s234] sm:$0xf]
      %v252 = vld [vmem:[%s234 + $0x4] sm:$0xf]
      %v253 = vld [vmem:[%s234 + $0x8] sm:$0xf]
      %v254 = vld [vmem:[%s234 + $0xc] sm:$0xf]
      %v255 = vld [vmem:[%s228] sm:$0x77]
      %v256 = vld [vmem:[%s228 + $0x8] sm:$0x77]
      %v259 = vcombine.high %v255, %v255
      %v260 = vcombine.high %v256, %v256
      %v263 = vpack.c.bf16 %v255, %v255
      %v264 = vpack.c.bf16 %v259, %v259
      %v265 = vpack.c.bf16 %v256, %v256
      %v266 = vpack.c.bf16 %v260, %v260
      %v267 = vld [vmem:[%s239] sm:$0xff]
      %v268 = vld [vmem:[%s239 + $0x8] sm:$0xff]
      %v269 = vld [vmem:[%s239 + $0x10] sm:$0xff]
      %v270 = vld [vmem:[%s239 + $0x18] sm:$0xff]
      %272 = vset.pattern.permute.xlu0 0
      %273 = vperm.xlu0 %272, %v267
      %v274 = vpop.permute.xlu0 %273
      %277 = vset.pattern.permute.xlu0 0
      %278 = vperm.xlu0 %277, %v268
      %v279 = vpop.permute.xlu0 %278
      %282 = vset.pattern.permute.xlu0 0
      %283 = vperm.xlu0 %282, %v269
      %v284 = vpop.permute.xlu0 %283
      %287 = vset.pattern.permute.xlu0 0
      %288 = vperm.xlu0 %287, %v270
      %v289 = vpop.permute.xlu0 %288
      %v295 = vunpack.c.l.b16 %v251
      %v296 = vunpack.c.l.b16 %v252
      %v297 = vunpack.c.l.b16 %v253
      %v298 = vunpack.c.l.b16 %v254
      %v299 = vpack.c.b16 %v296, %v295
      %v300 = vpack.c.b16 %v298, %v297
      %vm301 = vcmask 23552
      %v303 = vsel %vm301, %v299, 0
      %v306 = vsel %vm301, %v300, 0
      %vm308 = vcmask 1040384
      %vm309 = vcmask 1041408
      %v310 = vsel %vm308, 4294967295, 65535
      %v311 = vsel %vm309, %v310, 0
      %v313 = vand.u32 %v263, %v311
      %v316 = vand.u32 %v264, %v311
      %v319 = vand.u32 %v265, %v311
      %v322 = vand.u32 %v266, %v311
      %324 = vmatprep.subr.bf16.mxu0 0
      %325 = vmatpush1.bf16.msra.mxu0 0
      %326 = vmatprep.subr.bf16.mxu0 0
      %327 = vmatpush1.bf16.msra.mxu0 0
      %328 = vmatprep.subr.bf16.mxu0 0
      %329 = vmatpush1.bf16.msra.mxu0 0
      %330 = vmatprep.subr.bf16.mxu0 0
      %331 = vmatpush1.bf16.msra.mxu0 0
      %332 = vmatprep.subr.bf16.mxu0 0
      %333 = vmatpush1.bf16.msra.mxu0 0
      %334 = vmatprep.subr.bf16.mxu0 0
      %335 = vmatpush1.bf16.msra.mxu0 0
      %336 = vmatprep.subr.bf16.mxu0 0
      %337 = vmatpush1.bf16.msra.mxu0 0
      %338 = vmatprep.subr.bf16.mxu0 %v316
      %339 = vmatpush1.bf16.msra.mxu0 %v313
      %340 = vmatprep.subr.bf16.mxu0 0
      %341 = vmatpush2.bf16.msra.mxu0 0
      %342 = vmatprep.subr.bf16.mxu0 0
      %343 = vmatpush2.bf16.msra.mxu0 0
      %344 = vmatprep.subr.bf16.mxu0 0
      %345 = vmatpush2.bf16.msra.mxu0 0
      %346 = vmatprep.subr.bf16.mxu0 0
      %347 = vmatpush2.bf16.msra.mxu0 0
      %348 = vmatprep.subr.bf16.mxu0 0
      %349 = vmatpush2.bf16.msra.mxu0 0
      %350 = vmatprep.subr.bf16.mxu0 0
      %351 = vmatpush2.bf16.msra.mxu0 0
      %352 = vmatprep.subr.bf16.mxu0 0
      %353 = vmatpush2.bf16.msra.mxu0 0
      %354 = vmatprep.subr.bf16.mxu0 0
      %355 = vmatpush2.bf16.msra.mxu0 0
      %356 = vmatprep.mubr.bf16.mxu0 0
      %357 = vmatmul.mubr.bf16.gmra.mxu0 %v303
      %v358 = vpop.f32.mrf.mxu0
      %v359 = vadd.f32 %v274, %v358
      %v360 = vpop.f32.mrf.mxu0
      %v361 = vadd.f32 %v274, %v360
      %v362 = vpop.f32.mrf.mxu0
      %v363 = vadd.f32 %v279, %v362
      %v364 = vpop.f32.mrf.mxu0
      %v365 = vadd.f32 %v279, %v364
      %366 = vmatprep.mubr.bf16.mxu0 0
      %367 = vmatmul.mubr.bf16.gmra.mxu0 %v306
      %v368 = vpop.f32.mrf.mxu0
      %v369 = vadd.f32 %v284, %v368
      %v370 = vpop.f32.mrf.mxu0
      %v371 = vadd.f32 %v284, %v370
      %v372 = vpop.f32.mrf.mxu0
      %v373 = vadd.f32 %v289, %v372
      %v374 = vpop.f32.mrf.mxu0
      %v375 = vadd.f32 %v289, %v374
      %376 = vdwg.mxu0
      %377 = vmatprep.subr.bf16.mxu0 0
      %378 = vmatpush1.bf16.msra.mxu0 0
      %379 = vmatprep.subr.bf16.mxu0 0
      %380 = vmatpush1.bf16.msra.mxu0 0
      %381 = vmatprep.subr.bf16.mxu0 0
      %382 = vmatpush1.bf16.msra.mxu0 0
      %383 = vmatprep.subr.bf16.mxu0 0
      %384 = vmatpush1.bf16.msra.mxu0 0
      %385 = vmatprep.subr.bf16.mxu0 0
      %386 = vmatpush1.bf16.msra.mxu0 0
      %387 = vmatprep.subr.bf16.mxu0 0
      %388 = vmatpush1.bf16.msra.mxu0 0
      %389 = vmatprep.subr.bf16.mxu0 0
      %390 = vmatpush1.bf16.msra.mxu0 0
      %391 = vmatprep.subr.bf16.mxu0 %v322
      %392 = vmatpush1.bf16.msra.mxu0 %v319
      %393 = vmatprep.subr.bf16.mxu0 0
      %394 = vmatpush2.bf16.msra.mxu0 0
      %395 = vmatprep.subr.bf16.mxu0 0
      %396 = vmatpush2.bf16.msra.mxu0 0
      %397 = vmatprep.subr.bf16.mxu0 0
      %398 = vmatpush2.bf16.msra.mxu0 0
      %399 = vmatprep.subr.bf16.mxu0 0
      %400 = vmatpush2.bf16.msra.mxu0 0
      %401 = vmatprep.subr.bf16.mxu0 0
      %402 = vmatpush2.bf16.msra.mxu0 0
      %403 = vmatprep.subr.bf16.mxu0 0
      %404 = vmatpush2.bf16.msra.mxu0 0
      %405 = vmatprep.subr.bf16.mxu0 0
      %406 = vmatpush2.bf16.msra.mxu0 0
      %407 = vmatprep.subr.bf16.mxu0 0
      %408 = vmatpush2.bf16.msra.mxu0 0
      %409 = vmatprep.mubr.bf16.mxu0 0
      %410 = vmatmul.mubr.bf16.gmra.mxu0 %v303
      %v411 = vpop.f32.mrf.mxu0
      %v412 = vadd.f32 %v274, %v411
      %v413 = vpop.f32.mrf.mxu0
      %v414 = vadd.f32 %v274, %v413
      %v415 = vpop.f32.mrf.mxu0
      %v416 = vadd.f32 %v279, %v415
      %v417 = vpop.f32.mrf.mxu0
      %v418 = vadd.f32 %v279, %v417
      %419 = vmatprep.mubr.bf16.mxu0 0
      %420 = vmatmul.mubr.bf16.gmra.mxu0 %v306
      %v421 = vpop.f32.mrf.mxu0
      %v422 = vadd.f32 %v284, %v421
      %v423 = vpop.f32.mrf.mxu0
      %v424 = vadd.f32 %v284, %v423
      %v425 = vpop.f32.mrf.mxu0
      %v426 = vadd.f32 %v289, %v425
      %v427 = vpop.f32.mrf.mxu0
      %v428 = vadd.f32 %v289, %v427
      %429 = vdwg.mxu0
      %vm430 = vcmp.gt.f32.partialorder %v359, 0.0
      %vm431 = vcmp.gt.f32.partialorder %v361, 0.0
      %vm432 = vcmp.gt.f32.partialorder %v412, 0.0
      %vm433 = vcmp.gt.f32.partialorder %v414, 0.0
      %vm434 = vcmp.gt.f32.partialorder %v363, 0.0
      %vm435 = vcmp.gt.f32.partialorder %v365, 0.0
      %vm436 = vcmp.gt.f32.partialorder %v416, 0.0
      %vm437 = vcmp.gt.f32.partialorder %v418, 0.0
      %vm438 = vcmp.gt.f32.partialorder %v369, 0.0
      %vm439 = vcmp.gt.f32.partialorder %v371, 0.0
      %vm440 = vcmp.gt.f32.partialorder %v422, 0.0
      %vm441 = vcmp.gt.f32.partialorder %v424, 0.0
      %vm442 = vcmp.gt.f32.partialorder %v373, 0.0
      %vm443 = vcmp.gt.f32.partialorder %v375, 0.0
      %vm444 = vcmp.gt.f32.partialorder %v426, 0.0
      %vm445 = vcmp.gt.f32.partialorder %v428, 0.0
      %v446 = vmul.f32 %v359, 0.01
      %v447 = vmul.f32 %v361, 0.01
      %v448 = vmul.f32 %v412, 0.01
      %v449 = vmul.f32 %v414, 0.01
      %v450 = vmul.f32 %v363, 0.01
      %v451 = vmul.f32 %v365, 0.01
      %v452 = vmul.f32 %v416, 0.01
      %v453 = vmul.f32 %v418, 0.01
      %v454 = vmul.f32 %v369, 0.01
      %v455 = vmul.f32 %v371, 0.01
      %v456 = vmul.f32 %v422, 0.01
      %v457 = vmul.f32 %v424, 0.01
      %v458 = vmul.f32 %v373, 0.01
      %v459 = vmul.f32 %v375, 0.01
      %v460 = vmul.f32 %v426, 0.01
      %v461 = vmul.f32 %v428, 0.01
      %v462 = vsel %vm430, %v359, %v446
      %v463 = vsel %vm431, %v361, %v447
      %v464 = vsel %vm432, %v412, %v448
      %v465 = vsel %vm433, %v414, %v449
      %v466 = vsel %vm434, %v363, %v450
      %v467 = vsel %vm435, %v365, %v451
      %v468 = vsel %vm436, %v416, %v452
      %v469 = vsel %vm437, %v418, %v453
      %v470 = vsel %vm438, %v369, %v454
      %v471 = vsel %vm439, %v371, %v455
      %v472 = vsel %vm440, %v422, %v456
      %v473 = vsel %vm441, %v424, %v457
      %v474 = vsel %vm442, %v373, %v458
      %v475 = vsel %vm443, %v375, %v459
      %v476 = vsel %vm444, %v426, %v460
      %v477 = vsel %vm445, %v428, %v461
      %478 = vst [vmem:[%s248] sm:$0xff] %v462
      %479 = vst [vmem:[%s248 + $0x8] sm:$0xff] %v463
      %480 = vst [vmem:[%s248 + $0x10] sm:$0xff] %v464
      %481 = vst [vmem:[%s248 + $0x18] sm:$0xff] %v465
      %482 = vst [vmem:[%s248 + $0x20] sm:$0xff] %v466
      %483 = vst [vmem:[%s248 + $0x28] sm:$0xff] %v467
      %484 = vst [vmem:[%s248 + $0x30] sm:$0xff] %v468
      %485 = vst [vmem:[%s248 + $0x38] sm:$0xff] %v469
      %486 = vst [vmem:[%s248 + $0x40] sm:$0xff] %v470
      %487 = vst [vmem:[%s248 + $0x48] sm:$0xff] %v471
      %488 = vst [vmem:[%s248 + $0x50] sm:$0xff] %v472
      %489 = vst [vmem:[%s248 + $0x58] sm:$0xff] %v473
      %490 = vst [vmem:[%s248 + $0x60] sm:$0xff] %v474
      %491 = vst [vmem:[%s248 + $0x68] sm:$0xff] %v475
      %492 = vst [vmem:[%s248 + $0x70] sm:$0xff] %v476
      %493 = vst [vmem:[%s248 + $0x78] sm:$0xff] %v477
      %s494 = smul.u32 4, %s19
      %p495 = scmp.lt.s32.totalorder %s18, 1
      %s496 = scalar_select %p495, %s18, 1
      %p497 = scmp.lt.s32.totalorder %s494, 3
      %s498 = scalar_select %p497, %s494, 3
      %s499 = smul.addr %s496, 16
      %s500 = sadd.s32 %s498, %s499
      %s501 = smul.addr %s500, 8
      %s502 = scalar_lea.vmem %s3, %s501
      // Predicated region
      $region33: #{gradless_gc_replay_nonlin_block_3d.1} parent=31 // pred_check
        %p503 = pneg %p126
      $region34: #{gradless_gc_replay_nonlin_block_3d.1} parent=31 // pred_check_branch
        %505 = sbr.rel (%p503) target = $region36
      $region35: #{gradless_gc_replay_nonlin_block_3d.1} parent=31 // pred_region
        %s506 = smul.u32 4, %s19
      $region36: #{gradless_gc_replay_nonlin_block_3d.1} parent=31 // pred_fallthru
        _
    $region32: #{gradless_gc_replay_nonlin_block_3d.1} parent=5 // pred_fallthru
      _
    %p507 = scmp.le.s32.totalorder 2, %s9
    // Predicated region
    $region37: #{gradless_gc_replay_nonlin_block_3d.1} parent=5 // pred_check
      %p508 = pneg %p507
    $region38: #{gradless_gc_replay_nonlin_block_3d.1} parent=5 // pred_check_branch
      %510 = sbr.rel (%p508) target = $region40
    $region39: #{gradless_gc_replay_nonlin_block_3d.1} parent=5 // pred_region
      %s511 = ssub.s32 %s9, 2
      // Predicated region
      $region41: #{gradless_gc_replay_nonlin_block_3d.1} parent=39 // pred_check
        %p512 = pneg %p132
      $region42: #{gradless_gc_replay_nonlin_block_3d.1} parent=39 // pred_check_branch
        %514 = sbr.rel (%p512) target = $region44
      $region43: #{gradless_gc_replay_nonlin_block_3d.1} parent=39 // pred_region
        %s515 = smul.u32 4, %s21
        %p516 = scmp.lt.s32.totalorder %s20, 1
        %s517 = scalar_select %p516, %s20, 1
        %p518 = scmp.lt.s32.totalorder %s515, 3
        %s519 = scalar_select %p518, %s515, 3
        %s520 = smul.addr %s517, 16
        %s521 = sadd.s32 %s519, %s520
        %s522 = smul.addr %s521, 8
        %s523 = scalar_lea.vmem %s3, %s522
      $region44: #{gradless_gc_replay_nonlin_block_3d.1} parent=39 // pred_fallthru
        _
    $region40: #{gradless_gc_replay_nonlin_block_3d.1} parent=5 // pred_fallthru
      _
  $region6: #{gradless_gc_replay_nonlin_block_3d.1} parent=0 // loop_footer
    %s13 = sadd.s32 1, %s9
  $region7: #{gradless_gc_replay_nonlin_block_3d.1} parent=0 // loop_footer_branch
    %8 = sbr.rel target = $region3
  $region8: #{gradless_gc_replay_nonlin_block_3d.1} parent=0 // loop_exit
    _

</llo_original>
